<compile_context>
chip_gen: v6e
topology: v6e:2x2x1
jax: 0.10.0
libtpu: 0.0.40
codegen_flags: <defaults>
</compile_context>

<pallas_src>
import jax
import jax.numpy as jnp
from jax.experimental import pallas as pl
from jax.experimental.pallas import tpu as pltpu

K_SHRINK = 1   # the module's forward reads a (buggy) global `k`; default k=1

_BLOCK_BUDGET = 8 * 1024 * 1024      # bytes per streamed input block (double-buffered)
_VMEM_FLOOR = 32 * 1024 * 1024       # never request less scoped VMEM than this
_VMEM_CEIL = 48 * 1024 * 1024        # stay well under v7x's 64 MiB physical VMEM


def _compiler_params(in_block_bytes, out_block_bytes):
    # 2x input block (pipeline double-buffer) + resident output block + headroom.
    need = 2 * in_block_bytes + out_block_bytes + (8 << 20)
    return pltpu.CompilerParams(
        dimension_semantics=("arbitrary",),          # reduction axis
        vmem_limit_bytes=int(min(_VMEM_CEIL, max(_VMEM_FLOOR, need))))


def _gram_rowspace_kernel(x_ref, g_ref):
    """G += X_k @ X_k^T, contracting the feature (lane-dense) axis of both operands."""
    @pl.when(pl.program_id(0) == 0)
    def _():
        g_ref[...] = jnp.zeros_like(g_ref)

    xk = x_ref[...]                                   # (n, tk), native dtype
    g_ref[...] += jax.lax.dot_general(
        xk, xk,
        dimension_numbers=(((1,), (1,)), ((), ())),   # contract dim 1 of both; no .T
        preferred_element_type=jnp.float32)


def _gram_colspace_kernel(x_ref, g_ref):
    """G += X_k^T @ X_k, contracting the row (batch) axis of both operands."""
    @pl.when(pl.program_id(0) == 0)
    def _():
        g_ref[...] = jnp.zeros_like(g_ref)

    xk = x_ref[...]                                   # (tk, d), native dtype
    g_ref[...] += jax.lax.dot_general(
        xk, xk,
        dimension_numbers=(((0,), (0,)), ((), ())),
        preferred_element_type=jnp.float32)


def _gram_rowspace(x, *, tk_cap=4096):
    """G = x @ x.T (n x n), reduction tiled over the feature axis of the native layout."""
    n, d = x.shape
    itemsize = jnp.dtype(x.dtype).itemsize
    row_bytes = max(1, n * itemsize)
    fit = max(128, (_BLOCK_BUDGET // row_bytes) // 128 * 128)
    tk_cap = min(tk_cap, fit)
    if d <= tk_cap:
        tk = d                      # single grid step; block == full array dims
    else:
        tk = tk_cap                 # multiple of 128 — lane-dense reduction tiles
        d_pad = pl.cdiv(d, tk) * tk
        if d_pad != d:              # zero columns contribute nothing to the Gram
            x = jnp.pad(x, ((0, 0), (0, d_pad - d)))
        d = d_pad
    in_block_bytes = n * tk * itemsize
    out_block_bytes = n * n * 4
    cost = pl.CostEstimate(flops=2 * n * n * d, transcendentals=0,
                           bytes_accessed=n * d * itemsize + n * n * 4)
    return pl.pallas_call(
        _gram_rowspace_kernel,
        out_shape=jax.ShapeDtypeStruct((n, n), jnp.float32),
        grid_spec=pltpu.PrefetchScalarGridSpec(
            num_scalar_prefetch=0,
            grid=(d // tk,),
            in_specs=[pl.BlockSpec((n, tk), lambda kk: (0, kk))],
            out_specs=pl.BlockSpec((n, n), lambda kk: (0, 0)),
        ),
        compiler_params=_compiler_params(in_block_bytes, out_block_bytes),
        cost_estimate=cost,
    )(x)


def _gram_colspace(x, *, tk_cap=2048):
    """G = x.T @ x (d x d) from the native (n, d) layout — no HBM transpose."""
    n, d = x.shape
    itemsize = jnp.dtype(x.dtype).itemsize
    col_bytes = max(1, d * itemsize)
    fit = max(8, (_BLOCK_BUDGET // col_bytes) // 8 * 8)
    tk_cap = min(tk_cap, fit)
    if n <= tk_cap:
        tk = n                      # single grid step; block == full array dims
    else:
        tk = tk_cap                 # multiple-of-8 row tiles
        n_pad = pl.cdiv(n, tk) * tk
        if n_pad != n:              # zero rows contribute nothing to the Gram
            x = jnp.pad(x, ((0, n_pad - n), (0, 0)))
        n = n_pad
    # TODO(synk): a single (d, d) output block; very large d (> ~3K) would need 2-D
    # output tiling to stay inside scoped VMEM — fine for typical feature dims.
    in_block_bytes = tk * d * itemsize
    out_block_bytes = d * d * 4
    cost = pl.CostEstimate(flops=2 * d * d * n, transcendentals=0,
                           bytes_accessed=n * d * itemsize + d * d * 4)
    return pl.pallas_call(
        _gram_colspace_kernel,
        out_shape=jax.ShapeDtypeStruct((d, d), jnp.float32),
        grid_spec=pltpu.PrefetchScalarGridSpec(
            num_scalar_prefetch=0,
            grid=(n // tk,),
            in_specs=[pl.BlockSpec((tk, d), lambda kk: (kk, 0))],
            out_specs=pl.BlockSpec((d, d), lambda kk: (0, 0)),
        ),
        compiler_params=_compiler_params(in_block_bytes, out_block_bytes),
        cost_estimate=cost,
    )(x)


def batch_spectral_shrinkage(feature, k=K_SHRINK):
    """sum_{i<k} sigma_{smallest-i}(feature.T)^2 — same value as the PyTorch module."""
    n, d = feature.shape
    # Gram of the smaller side; its eigenvalues are the squared singular values.
    if n <= d:
        g = _gram_rowspace(feature)      # (n, n) = feature @ feature.T
    else:
        g = _gram_colspace(feature)      # (d, d) = feature.T @ feature, native layout
    # TODO(synk): the dense symmetric eigensolve has no clean Pallas equivalent; it
    # runs in plain JAX on the tiny min(n, d) x min(n, d) Gram matrix.
    evals = jnp.linalg.eigvalsh(g)                   # ascending order
    evals = jnp.maximum(evals, 0.0)                  # guard tiny negative round-off
    k = min(int(k), evals.shape[0])
    return jnp.sum(evals[:k])


if __name__ == "__main__":
    key = jax.random.PRNGKey(0)
    k1, k2 = jax.random.split(key)

    # n <= d branch: the module's typical (batch, feature_dim) input.
    N, D = 8, 256
    feat = jax.random.normal(k1, (N, D), dtype=jnp.float32)
    out = jax.block_until_ready(batch_spectral_shrinkage(feat, k=K_SHRINK))
    s_ref = jnp.linalg.svd(feat.T, compute_uv=False)
    ref = jnp.sum(jnp.sort(s_ref)[:K_SHRINK] ** 2)
    assert jnp.allclose(out, ref, rtol=1e-2, atol=1e-2), (float(out), float(ref))

    # n > d branch: exercises the native-layout X^T @ X kernel (no HBM transpose).
    N2, D2 = 64, 32
    feat2 = jax.random.normal(k2, (N2, D2), dtype=jnp.float32)
    out2 = jax.block_until_ready(batch_spectral_shrinkage(feat2, k=K_SHRINK))
    s_ref2 = jnp.linalg.svd(feat2.T, compute_uv=False)
    ref2 = jnp.sum(jnp.sort(s_ref2)[:K_SHRINK] ** 2)
    assert jnp.allclose(out2, ref2, rtol=1e-2, atol=1e-2), (float(out2), float(ref2))

    print("KERNEL_OK")
</pallas_src>

<mosaic_0001>
module attributes {stable_mosaic.version = 11 : i64} {
  func.func @_gram_rowspace_kernel(%arg0: i32, %arg1: memref<8x256xf32, #tpu.memory_space<vmem>>, %arg2: memref<8x8xf32, #tpu.memory_space<vmem>>) attributes {dimension_semantics = [#tpu.dimension_semantics<arbitrary>], iteration_bounds = array<i64: 1>, scalar_prefetch = 0 : i64, scratch_operands = 0 : i64, tpu.core_type = #tpu.core_type<tc>, window_params = [{transform_indices = @transform_0, window_bounds = array<i64: 8, 256>}, {pipeline_mode = #tpu.pipeline_mode<synchronous>, transform_indices = @transform_1, window_bounds = array<i64: 8, 8>}]} {
    %c0_i32 = arith.constant 0 : i32
    %0 = arith.cmpi eq, %arg0, %c0_i32 : i32
    %1 = arith.extui %0 : i1 to i32
    %c0_i32_0 = arith.constant 0 : i32
    %2 = arith.cmpi ne, %1, %c0_i32_0 : i32
    scf.if %2 {
      %cst_6 = arith.constant 0.000000e+00 : f32
      %8 = vector.broadcast %cst_6 : f32 to vector<8x8xf32>
      %c0_7 = arith.constant 0 : index
      %c0_8 = arith.constant 0 : index
      %9 = vector.load %arg2[%c0_7, %c0_8] : memref<8x8xf32, #tpu.memory_space<vmem>>, vector<8x8xf32>
      tpu.vector_store %arg2[%c0_7, %c0_8], %8 {strides = array<i32>} : memref<8x8xf32, #tpu.memory_space<vmem>>, vector<8x8xf32>,
    } else {
    }
    %c0 = arith.constant 0 : index
    %c0_1 = arith.constant 0 : index
    %3 = vector.load %arg1[%c0, %c0_1] : memref<8x256xf32, #tpu.memory_space<vmem>>, vector<8x256xf32>
    %c0_2 = arith.constant 0 : index
    %c0_3 = arith.constant 0 : index
    %4 = vector.load %arg2[%c0_2, %c0_3] : memref<8x8xf32, #tpu.memory_space<vmem>>, vector<8x8xf32>
    %cst = arith.constant dense<0.000000e+00> : vector<8x8xf32>
    %5 = tpu.matmul %3, %3, %cst {dimension_numbers = #tpu.dot_dimension_numbers<[1], [1], [0], [0], [0, 0, 1, 0], [], []>} : vector<8x256xf32>, vector<8x256xf32>, vector<8x8xf32> -> vector<8x8xf32>
    %6 = arith.addf %4, %5 : vector<8x8xf32>
    %c0_4 = arith.constant 0 : index
    %c0_5 = arith.constant 0 : index
    %7 = vector.load %arg2[%c0_4, %c0_5] : memref<8x8xf32, #tpu.memory_space<vmem>>, vector<8x8xf32>
    tpu.vector_store %arg2[%c0_4, %c0_5], %6 {strides = array<i32>} : memref<8x8xf32, #tpu.memory_space<vmem>>, vector<8x8xf32>,
    return
  }
  func.func @transform_0(%arg0: i32) -> (i32, i32) {
    %c0_i32 = arith.constant 0 : i32
    %c0_i32_0 = arith.constant 0 : i32
    return %c0_i32, %arg0 : i32, i32
  }
  func.func @transform_1(%arg0: i32) -> (i32, i32) {
    %c0_i32 = arith.constant 0 : i32
    %c0_i32_0 = arith.constant 0 : i32
    %c0_i32_1 = arith.constant 0 : i32
    return %c0_i32, %c0_i32_0 : i32, i32
  }
}

</mosaic_0001>

<llo_original>
// kernel: tpu_custom_call.1
$region0: #{tpu_custom_call.1}
  #allocation0 [shape = 'u32[]', space=smem, size = 0x4, offset = 0x4, fixed_abs, tag = 'smem constant byte address 0x4 - core index']
  #allocation1 [shape = 'u32[144,128]{1,0:T(1,128)}', space=vmem, size = 0x12000, scoped, tag = 'internal scratch']
  %s0 = inlined_call_operand.hbm [shape: f32[8,256], index: 0, kind: input, shape index: {}]
  %s1 = inlined_call_operand.hbm [shape: f32[8,8], index: 1, kind: output, shape index: {}]
  %s2 = sld [smem:[#allocation0]]
  $region22: #{tpu_custom_call.1} parent=0
    _
  %s4 = ssub.s32 1, %s2
  %s5 = scalar_select 0, %s4, %s2
  $region1: #{tpu_custom_call.1} parent=0
    #allocation2 [shape = 'u8[8192]{0}', space=vmem, size = 0x2000, scoped, tag = 'input window, operand 0, single buffered']
    #allocation3 [shape = 's32[1]{0}', space=sflag, size = 0x4, scoped, tag = 'scoped memory for tpu_custom_call.1']
    #allocation4 [shape = 's32[1]{0}', space=sflag, size = 0x4, scoped, tag = 'scoped memory for tpu_custom_call.1']
    #allocation5 [shape = 'u8[4096]{0}', space=vmem, size = 0x1000, scoped, tag = 'output window, operand 0, single buffered']
    %6 = vsyncpa [#allocation3], 0
    %7 = vsyncpa [#allocation4], 0
    // Predicated region
    $region2: #{tpu_custom_call.1} parent=1 // pred_check
      _
    $region3: #{tpu_custom_call.1} parent=1 // pred_check_branch
      %9 = sbr.rel (0) target = $region5
    $region4: #{tpu_custom_call.1} parent=1 // pred_region
      %s11 = ssub.s32 256, 256
      %12 = vsyncadd [#allocation3], %s11
      %s14 = sshll.u32 [#allocation2], 4
      %s15 = int_to_ptr.vmem [resolvable:$true] %s14
      %17 = dma.hbm_to_vmem [thread:$0]  %s0, 256, %s15, [#allocation3]
    $region5: #{tpu_custom_call.1} parent=1 // pred_fallthru
      _
    // Predicated region
    $region6: #{tpu_custom_call.1} parent=1 // pred_check
      _
    $region7: #{tpu_custom_call.1} parent=1 // pred_check_branch
      %19 = sbr.rel (0) target = $region9
    $region8: #{tpu_custom_call.1} parent=1 // pred_region
      %20 = dma.done [#allocation3], 256
    $region9: #{tpu_custom_call.1} parent=1 // pred_fallthru
      _
    %p21 = scmp.eq.s32.totalorder 0, 0
    // Predicated region
    $region10: #{tpu_custom_call.1} parent=1 // pred_check
      %p22 = pneg %p21
    $region11: #{tpu_custom_call.1} parent=1 // pred_check_branch
      %24 = sbr.rel (%p22) target = $region13
    $region12: #{tpu_custom_call.1} parent=1 // pred_region
      %vm25 = vcmask 64512
      %26 = vst.msk [vmem:[#allocation5] sm:$0xff] %vm25, 0.0
    $region13: #{tpu_custom_call.1} parent=1 // pred_fallthru
      _
    %v27 = vld [vmem:[#allocation2] sm:$0xff]
    %v28 = vld [vmem:[#allocation2 + $0x8] sm:$0xff]
    %v29 = vld [vmem:[#allocation5] sm:$0xff]
    %30 = vmatprep.subr.mxu0 0.0
    %31 = vmatpush1.xpose.msra.mxu0 0.0
    %32 = vmatprep.subr.mxu0 0.0
    %33 = vmatpush1.xpose.msra.mxu0 0.0
    %34 = vmatprep.subr.mxu0 0.0
    %35 = vmatpush1.xpose.msra.mxu0 0.0
    %36 = vmatprep.subr.mxu0 0.0
    %37 = vmatpush1.xpose.msra.mxu0 0.0
    %38 = vmatprep.subr.mxu0 0.0
    %39 = vmatpush1.xpose.msra.mxu0 0.0
    %40 = vmatprep.subr.mxu0 0.0
    %41 = vmatpush1.xpose.msra.mxu0 0.0
    %42 = vmatprep.subr.mxu0 0.0
    %43 = vmatpush1.xpose.msra.mxu0 0.0
    %44 = vmatprep.subr.mxu0 0.0
    %45 = vmatpush1.xpose.msra.mxu0 0.0
    %46 = vmatprep.subr.mxu0 0.0
    %47 = vmatpush1.xpose.msra.mxu0 0.0
    %48 = vmatprep.subr.mxu0 0.0
    %49 = vmatpush1.xpose.msra.mxu0 0.0
    %50 = vmatprep.subr.mxu0 0.0
    %51 = vmatpush1.xpose.msra.mxu0 0.0
    %52 = vmatprep.subr.mxu0 0.0
    %53 = vmatpush1.xpose.msra.mxu0 0.0
    %54 = vmatprep.subr.mxu0 0.0
    %55 = vmatpush1.xpose.msra.mxu0 0.0
    %56 = vmatprep.subr.mxu0 0.0
    %57 = vmatpush1.xpose.msra.mxu0 0.0
    %58 = vmatprep.subr.mxu0 0.0
    %59 = vmatpush1.xpose.msra.mxu0 0.0
    %60 = vmatprep.subr.mxu0 %v28
    %61 = vmatpush1.xpose.msra.mxu0 %v27
    %62 = vmatprep.subr.mxu0 0.0
    %63 = vmatpush2.xpose.msra.mxu0 0.0
    %64 = vmatprep.subr.mxu0 0.0
    %65 = vmatpush2.xpose.msra.mxu0 0.0
    %66 = vmatprep.subr.mxu0 0.0
    %67 = vmatpush2.xpose.msra.mxu0 0.0
    %68 = vmatprep.subr.mxu0 0.0
    %69 = vmatpush2.xpose.msra.mxu0 0.0
    %70 = vmatprep.subr.mxu0 0.0
    %71 = vmatpush2.xpose.msra.mxu0 0.0
    %72 = vmatprep.subr.mxu0 0.0
    %73 = vmatpush2.xpose.msra.mxu0 0.0
    %74 = vmatprep.subr.mxu0 0.0
    %75 = vmatpush2.xpose.msra.mxu0 0.0
    %76 = vmatprep.subr.mxu0 0.0
    %77 = vmatpush2.xpose.msra.mxu0 0.0
    %78 = vmatprep.subr.mxu0 0.0
    %79 = vmatpush2.xpose.msra.mxu0 0.0
    %80 = vmatprep.subr.mxu0 0.0
    %81 = vmatpush2.xpose.msra.mxu0 0.0
    %82 = vmatprep.subr.mxu0 0.0
    %83 = vmatpush2.xpose.msra.mxu0 0.0
    %84 = vmatprep.subr.mxu0 0.0
    %85 = vmatpush2.xpose.msra.mxu0 0.0
    %86 = vmatprep.subr.mxu0 0.0
    %87 = vmatpush2.xpose.msra.mxu0 0.0
    %88 = vmatprep.subr.mxu0 0.0
    %89 = vmatpush2.xpose.msra.mxu0 0.0
    %90 = vmatprep.subr.mxu0 0.0
    %91 = vmatpush2.xpose.msra.mxu0 0.0
    %92 = vmatprep.subr.mxu0 0.0
    %93 = vmatpush2.xpose.msra.mxu0 0.0
    %94 = vmatprep.mubr.f32.mxu0 %v28
    %95 = vmatmul.mubr.f32.gmra.mxu0 %v27
    %v96 = vpop.f32.mrf.mxu0
    %v97 = vadd.f32 0.0, %v96
    %v98 = vpop.f32.mrf.mxu0
    %99 = vdwg.mxu0
    %v100 = vadd.f32 %v29, %v97
    %vm101 = vcmask 64512
    %102 = vst.msk [vmem:[#allocation5] sm:$0xff] %vm101, %v100
    // Predicated region
    $region14: #{tpu_custom_call.1} parent=1 // pred_check
      _
    $region15: #{tpu_custom_call.1} parent=1 // pred_check_branch
      %104 = sbr.rel (0) target = $region17
    $region16: #{tpu_custom_call.1} parent=1 // pred_region
      %s106 = ssub.s32 128, 128
      %107 = vsyncadd [#allocation4], %s106
      %s109 = sshll.u32 [#allocation5], 4
      %s110 = int_to_ptr.vmem [resolvable:$true] %s109
      %112 = dma.vmem_to_hbm [thread:$0]  %s110, 128, %s1, [#allocation4]
    $region17: #{tpu_custom_call.1} parent=1 // pred_fallthru
      _
    // Predicated region
    $region18: #{tpu_custom_call.1} parent=1 // pred_check
      _
    $region19: #{tpu_custom_call.1} parent=1 // pred_check_branch
      %114 = sbr.rel (0) target = $region21
    $region20: #{tpu_custom_call.1} parent=1 // pred_region
      %115 = dma.done [#allocation4], 128
    $region21: #{tpu_custom_call.1} parent=1 // pred_fallthru
      _
    %116 = vsyncpa [#allocation3], 1
    %117 = vsyncpa [#allocation4], 1

</llo_original>
